<compile_context>
chip_gen: v5e
topology: v5e:2x2
jax: 0.10.0
libtpu: 0.0.40
codegen_flags: <defaults>
</compile_context>

<pallas_src>
import functools

import jax
import jax.numpy as jnp
from jax import lax
from jax.experimental import pallas as pl
from jax.experimental.pallas import tpu as pltpu


def _round_up(n, m):
    return ((n + m - 1) // m) * m


def _esf_kernel(x_ref,        # (1, T*BT, Din) bf16  rows ordered (t, b-in-tile)
                w_ih0_t_ref,  # (Din, Hp)      bf16  = W_ih0^T (zero-padded)
                w_hh0_t_ref,  # (Hp, Hp)       bf16  = W_hh0^T (zero-padded)
                b0_ref,       # (1, Hp)        f32   = b_ih0 + b_hh0
                w_cat1_ref,   # (2*Hp, Hp)     bf16  = [W_ih1^T ; W_hh1^T]
                b1_ref,       # (1, Hp)        f32   = b_ih1 + b_hh1
                gamma_ref,    # (1, Hp)        f32  (zero-padded lanes)
                beta_ref,     # (1, Hp)        f32
                w_fc_t_ref,   # (Hp, Ap)       bf16  = W_fc^T (zero-padded)
                b_fc_ref,     # (1, Ap)        f32
                out_ref,      # (BT, Ap)       f32
                xp_ref,       # scratch: (T, BT, Hp) bf16
                *, seq_len, batch_tile, hidden_size):
    T, BT = seq_len, batch_tile
    Hp = w_hh0_t_ref.shape[0]
    bf16 = jnp.bfloat16
    f32 = jnp.float32

    # ---- hoisted layer-0 input projection: ONE MXU matmul (M = T*BT) -------
    xp2d = jnp.dot(x_ref[0], w_ih0_t_ref[...],
                   preferred_element_type=f32) + b0_ref[...]       # (T*BT, Hp) f32
    for t in range(T):   # static, sublane-aligned slices -> cheap stores
        xp_ref[t] = xp2d[t * BT:(t + 1) * BT, :].astype(bf16)

    # ---- loop-invariant weights / bias broadcast hoisted --------------------
    w_hh0_t = w_hh0_t_ref[...]
    w_cat1 = w_cat1_ref[...]
    b1b = jnp.broadcast_to(b1_ref[...], (BT, Hp))

    def layer1(h0_bf, h1_bf):            # returns f32
        hcat = jnp.concatenate([h0_bf, h1_bf], axis=-1)            # (BT, 2Hp) bf16
        return jnp.tanh(jnp.dot(hcat, w_cat1,
                                preferred_element_type=f32) + b1b)

    # Prologue: h0[0] = tanh(xp[0])  (initial hidden state is zero).
    h0_0 = jnp.tanh(xp_ref[0].astype(f32)).astype(bf16)
    h1_init = jnp.zeros((BT, Hp), bf16)

    # Skewed recurrence: iteration t computes layer-0 at time t and layer-1 at
    # time t-1; the two are independent, so only the h0 chain is serial.
    def step(t, carry):
        h0_prev, h1_lag = carry                                    # h0[t-1], h1[t-2]
        a0 = xp_ref[t].astype(f32) + jnp.dot(h0_prev, w_hh0_t,
                                             preferred_element_type=f32)
        h0_t = jnp.tanh(a0).astype(bf16)                           # h0[t]
        h1_prev = layer1(h0_prev, h1_lag).astype(bf16)             # h1[t-1]
        return h0_t, h1_prev

    unroll = True if T <= 16 else 8
    h0_last, h1_lag = lax.fori_loop(1, T, step, (h0_0, h1_init), unroll=unroll)

    # Epilogue: final layer-1 step, kept in f32 for LayerNorm.
    h_last = layer1(h0_last, h1_lag)                               # (BT, Hp) f32

    # ---- LayerNorm over the REAL hidden lanes only --------------------------
    # Padded hidden lanes are exactly zero throughout the recurrence (weights,
    # biases and gamma are zero-padded), so sums over the padded array equal
    # sums over the real H lanes; divide by the real H.  E[x^2]-E[x]^2 keeps
    # the padded lanes out of the variance; clamp guards f32 rounding.
    inv_h = 1.0 / float(hidden_size)
    mean = jnp.sum(h_last, axis=-1, keepdims=True) * inv_h
    var = jnp.sum(h_last * h_last, axis=-1, keepdims=True) * inv_h - mean * mean
    var = jnp.maximum(var, 0.0)
    y = (h_last - mean) * lax.rsqrt(var + 1e-5)
    y = y * gamma_ref[...] + beta_ref[...]        # zero-padded gamma -> pad lanes = 0

    # Dropout is identity at inference time.
    out = jnp.dot(y.astype(bf16), w_fc_t_ref[...],
                  preferred_element_type=f32) + b_fc_ref[...]
    out_ref[...] = out.astype(out_ref.dtype)


def enable_state_model_forward(x, params):
    """x: (B, T, D_in) float32, batch-first like the PyTorch module."""
    B, T, Din = x.shape
    H = params["w_hh0"].shape[0]
    A = params["w_fc"].shape[0]
    bf16 = jnp.bfloat16

    Hp = _round_up(H, 128)            # hidden -> full lanes
    Ap = _round_up(A, 128)            # output -> lane-dense store

    # ---- batch-tile policy (maximize M; >=2 grid steps for v7x when possible)
    if B <= 8:
        BT = 8
    elif B <= 32:
        BT = _round_up(B, 8)                                   # whole batch, one tile
    elif B <= 256:
        BT = min(128, _round_up((B + 1) // 2, 16))             # 2 grid steps
    else:
        BT = 128
    Bp = _round_up(B, BT)
    nt = Bp // BT

    # ---- inputs: bf16, padded batch, pre-tiled & flattened per batch tile ----
    # rows within a tile are ordered (t, b_in_tile) so the hoisted projection
    # needs no in-kernel reshape and xp slab t is rows [t*BT, (t+1)*BT).
    x_p = jnp.pad(x.astype(bf16), ((0, Bp - B), (0, 0), (0, 0)))       # (Bp, T, Din)
    x_tiles = (x_p.reshape(nt, BT, T, Din)
                  .transpose(0, 2, 1, 3)
                  .reshape(nt, T * BT, Din))                           # (nt, T*BT, Din)

    def pad2(w, rows, cols):
        return jnp.pad(w, ((0, rows - w.shape[0]), (0, cols - w.shape[1])))

    w_ih0_t = pad2(params["w_ih0"].T, Din, Hp).astype(bf16)            # (Din, Hp)
    w_hh0_t = pad2(params["w_hh0"].T, Hp, Hp).astype(bf16)             # (Hp, Hp)
    b0 = pad2(params["b_ih0"] + params["b_hh0"], 1, Hp)                # (1, Hp)
    w_cat1 = jnp.concatenate(
        [pad2(params["w_ih1"].T, Hp, Hp), pad2(params["w_hh1"].T, Hp, Hp)],
        axis=0).astype(bf16)                                           # (2Hp, Hp)
    b1 = pad2(params["b_ih1"] + params["b_hh1"], 1, Hp)                # (1, Hp)
    gamma = pad2(params["ln_gamma"], 1, Hp)                            # zero-padded
    beta = pad2(params["ln_beta"], 1, Hp)
    w_fc_t = pad2(params["w_fc"].T, Hp, Ap).astype(bf16)               # (Hp, Ap)
    b_fc = pad2(params["b_fc"], 1, Ap)                                 # (1, Ap)

    weights = (w_ih0_t, w_hh0_t, b0, w_cat1, b1, gamma, beta, w_fc_t, b_fc)
    # Full-array blocks with a constant index_map: fetched once, kept resident.
    weight_specs = [pl.BlockSpec(w.shape, lambda b: (0, 0)) for w in weights]

    # ---- VMEM budget: blocks (double-buffered) + weights + bf16 scratch ------
    est = (2 * (T * BT * Din * 2)                                  # x block, bf16
           + 2 * (BT * Ap * 4)                                     # out block, f32
           + 2 * 2 * (Din * Hp + 3 * Hp * Hp + Hp * Ap)            # bf16 weights
           + 2 * 4 * (5 * Hp + Ap)                                 # f32 bias/LN rows
           + T * BT * Hp * 2)                                      # xp scratch, bf16
    vmem_limit = int(min(100 * 1024 * 1024, max(32 * 1024 * 1024, 2 * est)))

    out_p = pl.pallas_call(
        functools.partial(_esf_kernel, seq_len=T, batch_tile=BT, hidden_size=H),
        out_shape=jax.ShapeDtypeStruct((Bp, Ap), jnp.float32),
        grid=(nt,),
        in_specs=[pl.BlockSpec((1, T * BT, Din), lambda b: (b, 0, 0))] + weight_specs,
        out_specs=pl.BlockSpec((BT, Ap), lambda b: (b, 0)),
        scratch_shapes=[pltpu.VMEM((T, BT, Hp), jnp.bfloat16)],
        compiler_params=pltpu.CompilerParams(
            dimension_semantics=("parallel",),
            vmem_limit_bytes=vmem_limit),
    )(x_tiles, *weights)
    return out_p[:B, :A]


def init_params(key, input_size, hidden_size, num_activities):
    """Deterministic init mimicking PyTorch's U(-1/sqrt(H), 1/sqrt(H))."""
    ks = jax.random.split(key, 10)
    s = 1.0 / jnp.sqrt(hidden_size)
    u = lambda k, shp: jax.random.uniform(k, shp, jnp.float32, -s, s)
    return {
        "w_ih0": u(ks[0], (hidden_size, input_size)),
        "w_hh0": u(ks[1], (hidden_size, hidden_size)),
        "b_ih0": u(ks[2], (1, hidden_size)),
        "b_hh0": u(ks[3], (1, hidden_size)),
        "w_ih1": u(ks[4], (hidden_size, hidden_size)),
        "w_hh1": u(ks[5], (hidden_size, hidden_size)),
        "b_ih1": u(ks[6], (1, hidden_size)),
        "b_hh1": u(ks[7], (1, hidden_size)),
        "ln_gamma": jnp.ones((1, hidden_size), jnp.float32),
        "ln_beta": jnp.zeros((1, hidden_size), jnp.float32),
        "w_fc": u(ks[8], (num_activities, hidden_size)),
        "b_fc": u(ks[9], (1, num_activities)),
    }


def reference_forward(x, p):
    """Pure-JAX f32 reference (eval mode) for correctness checking."""
    B, T, _ = x.shape
    H = p["w_hh0"].shape[0]
    h0 = jnp.zeros((B, H), jnp.float32)
    h1 = jnp.zeros((B, H), jnp.float32)
    for t in range(T):
        xt = x[:, t, :]
        h0 = jnp.tanh(xt @ p["w_ih0"].T + p["b_ih0"] + h0 @ p["w_hh0"].T + p["b_hh0"])
        h1 = jnp.tanh(h0 @ p["w_ih1"].T + p["b_ih1"] + h1 @ p["w_hh1"].T + p["b_hh1"])
    mean = jnp.mean(h1, -1, keepdims=True)
    var = jnp.mean((h1 - mean) ** 2, -1, keepdims=True)
    y = (h1 - mean) / jnp.sqrt(var + 1e-5) * p["ln_gamma"] + p["ln_beta"]
    # dropout = identity at eval
    return y @ p["w_fc"].T + p["b_fc"]


if __name__ == "__main__":
    B, T = 2, 8
    input_size, hidden_size, num_activities = 8, 32, 8
    # dropout=0.1 in the module config; identity at inference, so unused here.

    key = jax.random.PRNGKey(0)
    kx, kp = jax.random.split(key)
    x = jax.random.normal(kx, (B, T, input_size), jnp.float32)
    params = init_params(kp, input_size, hidden_size, num_activities)

    out = jax.block_until_ready(enable_state_model_forward(x, params))
    ref = reference_forward(x, params)
    assert out.shape == (B, num_activities)
    # bf16 MXU inputs / bf16 carried hidden states (f32 accumulation) -> looser
    # tolerance than the pure-f32 reference; still catches any semantic bug.
    assert jnp.allclose(out, ref, atol=5e-2, rtol=5e-2), float(
        jnp.max(jnp.abs(out - ref)))
    print("KERNEL_OK")
</pallas_src>

<mosaic_0001>
module attributes {stable_mosaic.version = 11 : i64} {
  func.func @_esf_kernel(%arg0: i32, %arg1: memref<1x64x8xbf16, #tpu.memory_space<vmem>>, %arg2: memref<8x128xbf16, #tpu.memory_space<vmem>>, %arg3: memref<128x128xbf16, #tpu.memory_space<vmem>>, %arg4: memref<1x128xf32, #tpu.memory_space<vmem>>, %arg5: memref<256x128xbf16, #tpu.memory_space<vmem>>, %arg6: memref<1x128xf32, #tpu.memory_space<vmem>>, %arg7: memref<1x128xf32, #tpu.memory_space<vmem>>, %arg8: memref<1x128xf32, #tpu.memory_space<vmem>>, %arg9: memref<128x128xbf16, #tpu.memory_space<vmem>>, %arg10: memref<1x128xf32, #tpu.memory_space<vmem>>, %arg11: memref<8x128xf32, #tpu.memory_space<vmem>>, %arg12: memref<8x8x128xbf16, #tpu.memory_space<vmem>>) attributes {dimension_semantics = [#tpu.dimension_semantics<parallel>], iteration_bounds = array<i64: 1>, scalar_prefetch = 0 : i64, scratch_operands = 1 : i64, tpu.core_type = #tpu.core_type<tc>, window_params = [{transform_indices = @transform_0, window_bounds = array<i64: 1, 64, 8>}, {pipeline_mode = #tpu.pipeline_mode<synchronous>, transform_indices = @transform_1, window_bounds = array<i64: 8, 128>}, {pipeline_mode = #tpu.pipeline_mode<synchronous>, transform_indices = @transform_2, window_bounds = array<i64: 128, 128>}, {pipeline_mode = #tpu.pipeline_mode<synchronous>, transform_indices = @transform_3, window_bounds = array<i64: 1, 128>}, {pipeline_mode = #tpu.pipeline_mode<synchronous>, transform_indices = @transform_4, window_bounds = array<i64: 256, 128>}, {pipeline_mode = #tpu.pipeline_mode<synchronous>, transform_indices = @transform_5, window_bounds = array<i64: 1, 128>}, {pipeline_mode = #tpu.pipeline_mode<synchronous>, transform_indices = @transform_6, window_bounds = array<i64: 1, 128>}, {pipeline_mode = #tpu.pipeline_mode<synchronous>, transform_indices = @transform_7, window_bounds = array<i64: 1, 128>}, {pipeline_mode = #tpu.pipeline_mode<synchronous>, transform_indices = @transform_8, window_bounds = array<i64: 128, 128>}, {pipeline_mode = #tpu.pipeline_mode<synchronous>, transform_indices = @transform_9, window_bounds = array<i64: 1, 128>}, {transform_indices = @transform_10, window_bounds = array<i64: 8, 128>}]} {
    %c0 = arith.constant 0 : index
    %c0_0 = arith.constant 0 : index
    %c0_1 = arith.constant 0 : index
    %0 = vector.load %arg1[%c0, %c0_0, %c0_1] : memref<1x64x8xbf16, #tpu.memory_space<vmem>>, vector<1x64x8xbf16>
    %1 = vector.shape_cast %0 : vector<1x64x8xbf16> to vector<64x8xbf16>
    %c0_2 = arith.constant 0 : index
    %c0_3 = arith.constant 0 : index
    %2 = vector.load %arg2[%c0_2, %c0_3] : memref<8x128xbf16, #tpu.memory_space<vmem>>, vector<8x128xbf16>
    %cst = arith.constant dense<0.000000e+00> : vector<64x128xf32>
    %3 = tpu.matmul %1, %2, %cst {dimension_numbers = #tpu.dot_dimension_numbers<[1], [0], [0], [1], [0, 0, 1, 1], [], []>} : vector<64x8xbf16>, vector<8x128xbf16>, vector<64x128xf32> -> vector<64x128xf32>
    %c0_4 = arith.constant 0 : index
    %c0_5 = arith.constant 0 : index
    %4 = vector.load %arg4[%c0_4, %c0_5] : memref<1x128xf32, #tpu.memory_space<vmem>>, vector<1x128xf32>
    %5 = vector.broadcast %4 : vector<1x128xf32> to vector<64x128xf32>
    %6 = arith.addf %3, %5 : vector<64x128xf32>
    %7 = vector.extract_strided_slice %6 {offsets = [0, 0], sizes = [8, 128], strides = [1, 1]} : vector<64x128xf32> to vector<8x128xf32>
    %8 = arith.truncf %7 : vector<8x128xf32> to vector<8x128xbf16>
    %c0_6 = arith.constant 0 : index
    %c0_7 = arith.constant 0 : index
    %c0_8 = arith.constant 0 : index
    %9 = vector.load %arg12[%c0_6, %c0_7, %c0_8] : memref<8x8x128xbf16, #tpu.memory_space<vmem>>, vector<1x8x128xbf16>
    %10 = vector.shape_cast %9 : vector<1x8x128xbf16> to vector<8x128xbf16>
    %11 = vector.shape_cast %8 : vector<8x128xbf16> to vector<1x8x128xbf16>
    tpu.vector_store %arg12[%c0_6, %c0_7, %c0_8], %11 {strides = array<i32>} : memref<8x8x128xbf16, #tpu.memory_space<vmem>>, vector<1x8x128xbf16>,
    %12 = vector.extract_strided_slice %6 {offsets = [8, 0], sizes = [8, 128], strides = [1, 1]} : vector<64x128xf32> to vector<8x128xf32>
    %13 = arith.truncf %12 : vector<8x128xf32> to vector<8x128xbf16>
    %c1 = arith.constant 1 : index
    %c0_9 = arith.constant 0 : index
    %c0_10 = arith.constant 0 : index
    %14 = vector.load %arg12[%c1, %c0_9, %c0_10] : memref<8x8x128xbf16, #tpu.memory_space<vmem>>, vector<1x8x128xbf16>
    %15 = vector.shape_cast %14 : vector<1x8x128xbf16> to vector<8x128xbf16>
    %16 = vector.shape_cast %13 : vector<8x128xbf16> to vector<1x8x128xbf16>
    tpu.vector_store %arg12[%c1, %c0_9, %c0_10], %16 {strides = array<i32>} : memref<8x8x128xbf16, #tpu.memory_space<vmem>>, vector<1x8x128xbf16>,
    %17 = vector.extract_strided_slice %6 {offsets = [16, 0], sizes = [8, 128], strides = [1, 1]} : vector<64x128xf32> to vector<8x128xf32>
    %18 = arith.truncf %17 : vector<8x128xf32> to vector<8x128xbf16>
    %c2 = arith.constant 2 : index
    %c0_11 = arith.constant 0 : index
    %c0_12 = arith.constant 0 : index
    %19 = vector.load %arg12[%c2, %c0_11, %c0_12] : memref<8x8x128xbf16, #tpu.memory_space<vmem>>, vector<1x8x128xbf16>
    %20 = vector.shape_cast %19 : vector<1x8x128xbf16> to vector<8x128xbf16>
    %21 = vector.shape_cast %18 : vector<8x128xbf16> to vector<1x8x128xbf16>
    tpu.vector_store %arg12[%c2, %c0_11, %c0_12], %21 {strides = array<i32>} : memref<8x8x128xbf16, #tpu.memory_space<vmem>>, vector<1x8x128xbf16>,
    %22 = vector.extract_strided_slice %6 {offsets = [24, 0], sizes = [8, 128], strides = [1, 1]} : vector<64x128xf32> to vector<8x128xf32>
    %23 = arith.truncf %22 : vector<8x128xf32> to vector<8x128xbf16>
    %c3 = arith.constant 3 : index
    %c0_13 = arith.constant 0 : index
    %c0_14 = arith.constant 0 : index
    %24 = vector.load %arg12[%c3, %c0_13, %c0_14] : memref<8x8x128xbf16, #tpu.memory_space<vmem>>, vector<1x8x128xbf16>
    %25 = vector.shape_cast %24 : vector<1x8x128xbf16> to vector<8x128xbf16>
    %26 = vector.shape_cast %23 : vector<8x128xbf16> to vector<1x8x128xbf16>
    tpu.vector_store %arg12[%c3, %c0_13, %c0_14], %26 {strides = array<i32>} : memref<8x8x128xbf16, #tpu.memory_space<vmem>>, vector<1x8x128xbf16>,
    %27 = vector.extract_strided_slice %6 {offsets = [32, 0], sizes = [8, 128], strides = [1, 1]} : vector<64x128xf32> to vector<8x128xf32>
    %28 = arith.truncf %27 : vector<8x128xf32> to vector<8x128xbf16>
    %c4 = arith.constant 4 : index
    %c0_15 = arith.constant 0 : index
    %c0_16 = arith.constant 0 : index
    %29 = vector.load %arg12[%c4, %c0_15, %c0_16] : memref<8x8x128xbf16, #tpu.memory_space<vmem>>, vector<1x8x128xbf16>
    %30 = vector.shape_cast %29 : vector<1x8x128xbf16> to vector<8x128xbf16>
    %31 = vector.shape_cast %28 : vector<8x128xbf16> to vector<1x8x128xbf16>
    tpu.vector_store %arg12[%c4, %c0_15, %c0_16], %31 {strides = array<i32>} : memref<8x8x128xbf16, #tpu.memory_space<vmem>>, vector<1x8x128xbf16>,
    %32 = vector.extract_strided_slice %6 {offsets = [40, 0], sizes = [8, 128], strides = [1, 1]} : vector<64x128xf32> to vector<8x128xf32>
    %33 = arith.truncf %32 : vector<8x128xf32> to vector<8x128xbf16>
    %c5 = arith.constant 5 : index
    %c0_17 = arith.constant 0 : index
    %c0_18 = arith.constant 0 : index
    %34 = vector.load %arg12[%c5, %c0_17, %c0_18] : memref<8x8x128xbf16, #tpu.memory_space<vmem>>, vector<1x8x128xbf16>
    %35 = vector.shape_cast %34 : vector<1x8x128xbf16> to vector<8x128xbf16>
    %36 = vector.shape_cast %33 : vector<8x128xbf16> to vector<1x8x128xbf16>
    tpu.vector_store %arg12[%c5, %c0_17, %c0_18], %36 {strides = array<i32>} : memref<8x8x128xbf16, #tpu.memory_space<vmem>>, vector<1x8x128xbf16>,
    %37 = vector.extract_strided_slice %6 {offsets = [48, 0], sizes = [8, 128], strides = [1, 1]} : vector<64x128xf32> to vector<8x128xf32>
    %38 = arith.truncf %37 : vector<8x128xf32> to vector<8x128xbf16>
    %c6 = arith.constant 6 : index
    %c0_19 = arith.constant 0 : index
    %c0_20 = arith.constant 0 : index
    %39 = vector.load %arg12[%c6, %c0_19, %c0_20] : memref<8x8x128xbf16, #tpu.memory_space<vmem>>, vector<1x8x128xbf16>
    %40 = vector.shape_cast %39 : vector<1x8x128xbf16> to vector<8x128xbf16>
    %41 = vector.shape_cast %38 : vector<8x128xbf16> to vector<1x8x128xbf16>
    tpu.vector_store %arg12[%c6, %c0_19, %c0_20], %41 {strides = array<i32>} : memref<8x8x128xbf16, #tpu.memory_space<vmem>>, vector<1x8x128xbf16>,
    %42 = vector.extract_strided_slice %6 {offsets = [56, 0], sizes = [8, 128], strides = [1, 1]} : vector<64x128xf32> to vector<8x128xf32>
    %43 = arith.truncf %42 : vector<8x128xf32> to vector<8x128xbf16>
    %c7 = arith.constant 7 : index
    %c0_21 = arith.constant 0 : index
    %c0_22 = arith.constant 0 : index
    %44 = vector.load %arg12[%c7, %c0_21, %c0_22] : memref<8x8x128xbf16, #tpu.memory_space<vmem>>, vector<1x8x128xbf16>
    %45 = vector.shape_cast %44 : vector<1x8x128xbf16> to vector<8x128xbf16>
    %46 = vector.shape_cast %43 : vector<8x128xbf16> to vector<1x8x128xbf16>
    tpu.vector_store %arg12[%c7, %c0_21, %c0_22], %46 {strides = array<i32>} : memref<8x8x128xbf16, #tpu.memory_space<vmem>>, vector<1x8x128xbf16>,
    %c0_23 = arith.constant 0 : index
    %c0_24 = arith.constant 0 : index
    %47 = vector.load %arg3[%c0_23, %c0_24] : memref<128x128xbf16, #tpu.memory_space<vmem>>, vector<128x128xbf16>
    %c0_25 = arith.constant 0 : index
    %c0_26 = arith.constant 0 : index
    %48 = vector.load %arg5[%c0_25, %c0_26] : memref<256x128xbf16, #tpu.memory_space<vmem>>, vector<256x128xbf16>
    %c0_27 = arith.constant 0 : index
    %c0_28 = arith.constant 0 : index
    %49 = vector.load %arg6[%c0_27, %c0_28] : memref<1x128xf32, #tpu.memory_space<vmem>>, vector<1x128xf32>
    %50 = vector.shape_cast %49 : vector<1x128xf32> to vector<1x128xf32>
    %51 = vector.broadcast %50 : vector<1x128xf32> to vector<8x128xf32>
    %c0_29 = arith.constant 0 : index
    %c0_30 = arith.constant 0 : index
    %c0_31 = arith.constant 0 : index
    %52 = vector.load %arg12[%c0_29, %c0_30, %c0_31] : memref<8x8x128xbf16, #tpu.memory_space<vmem>>, vector<1x8x128xbf16>
    %53 = vector.shape_cast %52 : vector<1x8x128xbf16> to vector<8x128xbf16>
    %54 = arith.extf %53 : vector<8x128xbf16> to vector<8x128xf32>
    %55 = math.tanh %54 : vector<8x128xf32>
    %56 = arith.truncf %55 : vector<8x128xf32> to vector<8x128xbf16>
    %cst_32 = arith.constant 0.000000e+00 : bf16
    %57 = vector.broadcast %cst_32 : bf16 to vector<8x128xbf16>
    %c1_i32 = arith.constant 1 : i32
    %58 = arith.index_cast %c1_i32 : i32 to index
    %c0_33 = arith.constant 0 : index
    %c0_34 = arith.constant 0 : index
    %59 = vector.load %arg12[%58, %c0_33, %c0_34] : memref<8x8x128xbf16, #tpu.memory_space<vmem>>, vector<1x8x128xbf16>
    %60 = vector.shape_cast %59 : vector<1x8x128xbf16> to vector<8x128xbf16>
    %61 = arith.extf %60 : vector<8x128xbf16> to vector<8x128xf32>
    %cst_35 = arith.constant dense<0.000000e+00> : vector<8x128xf32>
    %62 = tpu.matmul %56, %47, %cst_35 {dimension_numbers = #tpu.dot_dimension_numbers<[1], [0], [0], [1], [0, 0, 1, 1], [], []>} : vector<8x128xbf16>, vector<128x128xbf16>, vector<8x128xf32> -> vector<8x128xf32>
    %63 = arith.addf %61, %62 : vector<8x128xf32>
    %64 = math.tanh %63 : vector<8x128xf32>
    %65 = arith.truncf %64 : vector<8x128xf32> to vector<8x128xbf16>
    %66 = tpu.concatenate %56, %57 in 1 : vector<8x128xbf16>, vector<8x128xbf16> -> vector<8x256xbf16>
    %cst_36 = arith.constant dense<0.000000e+00> : vector<8x128xf32>
    %67 = tpu.matmul %66, %48, %cst_36 {dimension_numbers = #tpu.dot_dimension_numbers<[1], [0], [0], [1], [0, 0, 1, 1], [], []>} : vector<8x256xbf16>, vector<256x128xbf16>, vector<8x128xf32> -> vector<8x128xf32>
    %68 = arith.addf %67, %51 : vector<8x128xf32>
    %69 = math.tanh %68 : vector<8x128xf32>
    %70 = arith.truncf %69 : vector<8x128xf32> to vector<8x128xbf16>
    %c2_i32 = arith.constant 2 : i32
    %71 = arith.index_cast %c2_i32 : i32 to index
    %c0_37 = arith.constant 0 : index
    %c0_38 = arith.constant 0 : index
    %72 = vector.load %arg12[%71, %c0_37, %c0_38] : memref<8x8x128xbf16, #tpu.memory_space<vmem>>, vector<1x8x128xbf16>
    %73 = vector.shape_cast %72 : vector<1x8x128xbf16> to vector<8x128xbf16>
    %74 = arith.extf %73 : vector<8x128xbf16> to vector<8x128xf32>
    %cst_39 = arith.constant dense<0.000000e+00> : vector<8x128xf32>
    %75 = tpu.matmul %65, %47, %cst_39 {dimension_numbers = #tpu.dot_dimension_numbers<[1], [0], [0], [1], [0, 0, 1, 1], [], []>} : vector<8x128xbf16>, vector<128x128xbf16>, vector<8x128xf32> -> vector<8x128xf32>
    %76 = arith.addf %74, %75 : vector<8x128xf32>
    %77 = math.tanh %76 : vector<8x128xf32>
    %78 = arith.truncf %77 : vector<8x128xf32> to vector<8x128xbf16>
    %79 = tpu.concatenate %65, %70 in 1 : vector<8x128xbf16>, vector<8x128xbf16> -> vector<8x256xbf16>
    %cst_40 = arith.constant dense<0.000000e+00> : vector<8x128xf32>
    %80 = tpu.matmul %79, %48, %cst_40 {dimension_numbers = #tpu.dot_dimension_numbers<[1], [0], [0], [1], [0, 0, 1, 1], [], []>} : vector<8x256xbf16>, vector<256x128xbf16>, vector<8x128xf32> -> vector<8x128xf32>
    %81 = arith.addf %80, %51 : vector<8x128xf32>
    %82 = math.tanh %81 : vector<8x128xf32>
    %83 = arith.truncf %82 : vector<8x128xf32> to vector<8x128xbf16>
    %c3_i32 = arith.constant 3 : i32
    %84 = arith.index_cast %c3_i32 : i32 to index
    %c0_41 = arith.constant 0 : index
    %c0_42 = arith.constant 0 : index
    %85 = vector.load %arg12[%84, %c0_41, %c0_42] : memref<8x8x128xbf16, #tpu.memory_space<vmem>>, vector<1x8x128xbf16>
    %86 = vector.shape_cast %85 : vector<1x8x128xbf16> to vector<8x128xbf16>
    %87 = arith.extf %86 : vector<8x128xbf16> to vector<8x128xf32>
    %cst_43 = arith.constant dense<0.000000e+00> : vector<8x128xf32>
    %88 = tpu.matmul %78, %47, %cst_43 {dimension_numbers = #tpu.dot_dimension_numbers<[1], [0], [0], [1], [0, 0, 1, 1], [], []>} : vector<8x128xbf16>, vector<128x128xbf16>, vector<8x128xf32> -> vector<8x128xf32>
    %89 = arith.addf %87, %88 : vector<8x128xf32>
    %90 = math.tanh %89 : vector<8x128xf32>
    %91 = arith.truncf %90 : vector<8x128xf32> to vector<8x128xbf16>
    %92 = tpu.concatenate %78, %83 in 1 : vector<8x128xbf16>, vector<8x128xbf16> -> vector<8x256xbf16>
    %cst_44 = arith.constant dense<0.000000e+00> : vector<8x128xf32>
    %93 = tpu.matmul %92, %48, %cst_44 {dimension_numbers = #tpu.dot_dimension_numbers<[1], [0], [0], [1], [0, 0, 1, 1], [], []>} : vector<8x256xbf16>, vector<256x128xbf16>, vector<8x128xf32> -> vector<8x128xf32>
    %94 = arith.addf %93, %51 : vector<8x128xf32>
    %95 = math.tanh %94 : vector<8x128xf32>
    %96 = arith.truncf %95 : vector<8x128xf32> to vector<8x128xbf16>
    %c4_i32 = arith.constant 4 : i32
    %97 = arith.index_cast %c4_i32 : i32 to index
    %c0_45 = arith.constant 0 : index
    %c0_46 = arith.constant 0 : index
    %98 = vector.load %arg12[%97, %c0_45, %c0_46] : memref<8x8x128xbf16, #tpu.memory_space<vmem>>, vector<1x8x128xbf16>
    %99 = vector.shape_cast %98 : vector<1x8x128xbf16> to vector<8x128xbf16>
    %100 = arith.extf %99 : vector<8x128xbf16> to vector<8x128xf32>
    %cst_47 = arith.constant dense<0.000000e+00> : vector<8x128xf32>
    %101 = tpu.matmul %91, %47, %cst_47 {dimension_numbers = #tpu.dot_dimension_numbers<[1], [0], [0], [1], [0, 0, 1, 1], [], []>} : vector<8x128xbf16>, vector<128x128xbf16>, vector<8x128xf32> -> vector<8x128xf32>
    %102 = arith.addf %100, %101 : vector<8x128xf32>
    %103 = math.tanh %102 : vector<8x128xf32>
    %104 = arith.truncf %103 : vector<8x128xf32> to vector<8x128xbf16>
    %105 = tpu.concatenate %91, %96 in 1 : vector<8x128xbf16>, vector<8x128xbf16> -> vector<8x256xbf16>
    %cst_48 = arith.constant dense<0.000000e+00> : vector<8x128xf32>
    %106 = tpu.matmul %105, %48, %cst_48 {dimension_numbers = #tpu.dot_dimension_numbers<[1], [0], [0], [1], [0, 0, 1, 1], [], []>} : vector<8x256xbf16>, vector<256x128xbf16>, vector<8x128xf32> -> vector<8x128xf32>
    %107 = arith.addf %106, %51 : vector<8x128xf32>
    %108 = math.tanh %107 : vector<8x128xf32>
    %109 = arith.truncf %108 : vector<8x128xf32> to vector<8x128xbf16>
    %c5_i32 = arith.constant 5 : i32
    %110 = arith.index_cast %c5_i32 : i32 to index
    %c0_49 = arith.constant 0 : index
    %c0_50 = arith.constant 0 : index
    %111 = vector.load %arg12[%110, %c0_49, %c0_50] : memref<8x8x128xbf16, #tpu.memory_space<vmem>>, vector<1x8x128xbf16>
    %112 = vector.shape_cast %111 : vector<1x8x128xbf16> to vector<8x128xbf16>
    %113 = arith.extf %112 : vector<8x128xbf16> to vector<8x128xf32>
    %cst_51 = arith.constant dense<0.000000e+00> : vector<8x128xf32>
    %114 = tpu.matmul %104, %47, %cst_51 {dimension_numbers = #tpu.dot_dimension_numbers<[1], [0], [0], [1], [0, 0, 1, 1], [], []>} : vector<8x128xbf16>, vector<128x128xbf16>, vector<8x128xf32> -> vector<8x128xf32>
    %115 = arith.addf %113, %114 : vector<8x128xf32>
    %116 = math.tanh %115 : vector<8x128xf32>
    %117 = arith.truncf %116 : vector<8x128xf32> to vector<8x128xbf16>
    %118 = tpu.concatenate %104, %109 in 1 : vector<8x128xbf16>, vector<8x128xbf16> -> vector<8x256xbf16>
    %cst_52 = arith.constant dense<0.000000e+00> : vector<8x128xf32>
    %119 = tpu.matmul %118, %48, %cst_52 {dimension_numbers = #tpu.dot_dimension_numbers<[1], [0], [0], [1], [0, 0, 1, 1], [], []>} : vector<8x256xbf16>, vector<256x128xbf16>, vector<8x128xf32> -> vector<8x128xf32>
    %120 = arith.addf %119, %51 : vector<8x128xf32>
    %121 = math.tanh %120 : vector<8x128xf32>
    %122 = arith.truncf %121 : vector<8x128xf32> to vector<8x128xbf16>
    %c6_i32 = arith.constant 6 : i32
    %123 = arith.index_cast %c6_i32 : i32 to index
    %c0_53 = arith.constant 0 : index
    %c0_54 = arith.constant 0 : index
    %124 = vector.load %arg12[%123, %c0_53, %c0_54] : memref<8x8x128xbf16, #tpu.memory_space<vmem>>, vector<1x8x128xbf16>
    %125 = vector.shape_cast %124 : vector<1x8x128xbf16> to vector<8x128xbf16>
    %126 = arith.extf %125 : vector<8x128xbf16> to vector<8x128xf32>
    %cst_55 = arith.constant dense<0.000000e+00> : vector<8x128xf32>
    %127 = tpu.matmul %117, %47, %cst_55 {dimension_numbers = #tpu.dot_dimension_numbers<[1], [0], [0], [1], [0, 0, 1, 1], [], []>} : vector<8x128xbf16>, vector<128x128xbf16>, vector<8x128xf32> -> vector<8x128xf32>
    %128 = arith.addf %126, %127 : vector<8x128xf32>
    %129 = math.tanh %128 : vector<8x128xf32>
    %130 = arith.truncf %129 : vector<8x128xf32> to vector<8x128xbf16>
    %131 = tpu.concatenate %117, %122 in 1 : vector<8x128xbf16>, vector<8x128xbf16> -> vector<8x256xbf16>
    %cst_56 = arith.constant dense<0.000000e+00> : vector<8x128xf32>
    %132 = tpu.matmul %131, %48, %cst_56 {dimension_numbers = #tpu.dot_dimension_numbers<[1], [0], [0], [1], [0, 0, 1, 1], [], []>} : vector<8x256xbf16>, vector<256x128xbf16>, vector<8x128xf32> -> vector<8x128xf32>
    %133 = arith.addf %132, %51 : vector<8x128xf32>
    %134 = math.tanh %133 : vector<8x128xf32>
    %135 = arith.truncf %134 : vector<8x128xf32> to vector<8x128xbf16>
    %c7_i32 = arith.constant 7 : i32
    %136 = arith.index_cast %c7_i32 : i32 to index
    %c0_57 = arith.constant 0 : index
    %c0_58 = arith.constant 0 : index
    %137 = vector.load %arg12[%136, %c0_57, %c0_58] : memref<8x8x128xbf16, #tpu.memory_space<vmem>>, vector<1x8x128xbf16>
    %138 = vector.shape_cast %137 : vector<1x8x128xbf16> to vector<8x128xbf16>
    %139 = arith.extf %138 : vector<8x128xbf16> to vector<8x128xf32>
    %cst_59 = arith.constant dense<0.000000e+00> : vector<8x128xf32>
    %140 = tpu.matmul %130, %47, %cst_59 {dimension_numbers = #tpu.dot_dimension_numbers<[1], [0], [0], [1], [0, 0, 1, 1], [], []>} : vector<8x128xbf16>, vector<128x128xbf16>, vector<8x128xf32> -> vector<8x128xf32>
    %141 = arith.addf %139, %140 : vector<8x128xf32>
    %142 = math.tanh %141 : vector<8x128xf32>
    %143 = arith.truncf %142 : vector<8x128xf32> to vector<8x128xbf16>
    %144 = tpu.concatenate %130, %135 in 1 : vector<8x128xbf16>, vector<8x128xbf16> -> vector<8x256xbf16>
    %cst_60 = arith.constant dense<0.000000e+00> : vector<8x128xf32>
    %145 = tpu.matmul %144, %48, %cst_60 {dimension_numbers = #tpu.dot_dimension_numbers<[1], [0], [0], [1], [0, 0, 1, 1], [], []>} : vector<8x256xbf16>, vector<256x128xbf16>, vector<8x128xf32> -> vector<8x128xf32>
    %146 = arith.addf %145, %51 : vector<8x128xf32>
    %147 = math.tanh %146 : vector<8x128xf32>
    %148 = arith.truncf %147 : vector<8x128xf32> to vector<8x128xbf16>
    %c7_i32_61 = arith.constant 7 : i32
    %149 = tpu.concatenate %143, %148 in 1 : vector<8x128xbf16>, vector<8x128xbf16> -> vector<8x256xbf16>
    %cst_62 = arith.constant dense<0.000000e+00> : vector<8x128xf32>
    %150 = tpu.matmul %149, %48, %cst_62 {dimension_numbers = #tpu.dot_dimension_numbers<[1], [0], [0], [1], [0, 0, 1, 1], [], []>} : vector<8x256xbf16>, vector<256x128xbf16>, vector<8x128xf32> -> vector<8x128xf32>
    %151 = arith.addf %150, %51 : vector<8x128xf32>
    %152 = math.tanh %151 : vector<8x128xf32>
    %cst_63 = arith.constant dense<0.000000e+00> : vector<8xf32>
    %153 = vector.multi_reduction <add>, %152, %cst_63 [1] : vector<8x128xf32> to vector<8xf32>
    %154 = vector.shape_cast %153 : vector<8xf32> to vector<8x1xf32>
    %cst_64 = arith.constant 3.125000e-02 : f32
    %155 = vector.broadcast %cst_64 : f32 to vector<8x1xf32>
    %156 = arith.mulf %154, %155 : vector<8x1xf32>
    %157 = arith.mulf %152, %152 : vector<8x128xf32>
    %cst_65 = arith.constant dense<0.000000e+00> : vector<8xf32>
    %158 = vector.multi_reduction <add>, %157, %cst_65 [1] : vector<8x128xf32> to vector<8xf32>
    %159 = vector.shape_cast %158 : vector<8xf32> to vector<8x1xf32>
    %cst_66 = arith.constant 3.125000e-02 : f32
    %160 = vector.broadcast %cst_66 : f32 to vector<8x1xf32>
    %161 = arith.mulf %159, %160 : vector<8x1xf32>
    %162 = arith.mulf %156, %156 : vector<8x1xf32>
    %163 = arith.subf %161, %162 : vector<8x1xf32>
    %cst_67 = arith.constant 0.000000e+00 : f32
    %164 = vector.broadcast %cst_67 : f32 to vector<8x1xf32>
    %165 = arith.maximumf %163, %164 : vector<8x1xf32>
    %166 = vector.broadcast %156 : vector<8x1xf32> to vector<8x128xf32>
    %167 = arith.subf %152, %166 : vector<8x128xf32>
    %cst_68 = arith.constant 9.99999974E-6 : f32
    %168 = vector.broadcast %cst_68 : f32 to vector<8x1xf32>
    %169 = arith.addf %165, %168 : vector<8x1xf32>
    %170 = math.rsqrt %169 : vector<8x1xf32>
    %171 = vector.broadcast %170 : vector<8x1xf32> to vector<8x128xf32>
    %172 = arith.mulf %167, %171 : vector<8x128xf32>
    %c0_69 = arith.constant 0 : index
    %c0_70 = arith.constant 0 : index
    %173 = vector.load %arg7[%c0_69, %c0_70] : memref<1x128xf32, #tpu.memory_space<vmem>>, vector<1x128xf32>
    %174 = vector.broadcast %173 : vector<1x128xf32> to vector<8x128xf32>
    %175 = arith.mulf %172, %174 : vector<8x128xf32>
    %c0_71 = arith.constant 0 : index
    %c0_72 = arith.constant 0 : index
    %176 = vector.load %arg8[%c0_71, %c0_72] : memref<1x128xf32, #tpu.memory_space<vmem>>, vector<1x128xf32>
    %177 = vector.broadcast %176 : vector<1x128xf32> to vector<8x128xf32>
    %178 = arith.addf %175, %177 : vector<8x128xf32>
    %179 = arith.truncf %178 : vector<8x128xf32> to vector<8x128xbf16>
    %c0_73 = arith.constant 0 : index
    %c0_74 = arith.constant 0 : index
    %180 = vector.load %arg9[%c0_73, %c0_74] : memref<128x128xbf16, #tpu.memory_space<vmem>>, vector<128x128xbf16>
    %cst_75 = arith.constant dense<0.000000e+00> : vector<8x128xf32>
    %181 = tpu.matmul %179, %180, %cst_75 {dimension_numbers = #tpu.dot_dimension_numbers<[1], [0], [0], [1], [0, 0, 1, 1], [], []>} : vector<8x128xbf16>, vector<128x128xbf16>, vector<8x128xf32> -> vector<8x128xf32>
    %c0_76 = arith.constant 0 : index
    %c0_77 = arith.constant 0 : index
    %182 = vector.load %arg10[%c0_76, %c0_77] : memref<1x128xf32, #tpu.memory_space<vmem>>, vector<1x128xf32>
    %183 = vector.broadcast %182 : vector<1x128xf32> to vector<8x128xf32>
    %184 = arith.addf %181, %183 : vector<8x128xf32>
    %c0_78 = arith.constant 0 : index
    %c0_79 = arith.constant 0 : index
    %185 = vector.load %arg11[%c0_78, %c0_79] : memref<8x128xf32, #tpu.memory_space<vmem>>, vector<8x128xf32>
    tpu.vector_store %arg11[%c0_78, %c0_79], %184 {strides = array<i32>} : memref<8x128xf32, #tpu.memory_space<vmem>>, vector<8x128xf32>,
    return
  }
  func.func @transform_0(%arg0: i32) -> (i32, i32, i32) {
    %c0_i32 = arith.constant 0 : i32
    %c0_i32_0 = arith.constant 0 : i32
    %c0_i32_1 = arith.constant 0 : i32
    return %arg0, %c0_i32, %c0_i32_0 : i32, i32, i32
  }
  func.func @transform_1(%arg0: i32) -> (i32, i32) {
    %c0_i32 = arith.constant 0 : i32
    %c0_i32_0 = arith.constant 0 : i32
    %c0_i32_1 = arith.constant 0 : i32
    return %c0_i32, %c0_i32_0 : i32, i32
  }
  func.func @transform_2(%arg0: i32) -> (i32, i32) {
    %c0_i32 = arith.constant 0 : i32
    %c0_i32_0 = arith.constant 0 : i32
    %c0_i32_1 = arith.constant 0 : i32
    return %c0_i32, %c0_i32_0 : i32, i32
  }
  func.func @transform_3(%arg0: i32) -> (i32, i32) {
    %c0_i32 = arith.constant 0 : i32
    %c0_i32_0 = arith.constant 0 : i32
    %c0_i32_1 = arith.constant 0 : i32
    return %c0_i32, %c0_i32_0 : i32, i32
  }
  func.func @transform_4(%arg0: i32) -> (i32, i32) {
    %c0_i32 = arith.constant 0 : i32
    %c0_i32_0 = arith.constant 0 : i32
    %c0_i32_1 = arith.constant 0 : i32
    return %c0_i32, %c0_i32_0 : i32, i32
  }
  func.func @transform_5(%arg0: i32) -> (i32, i32) {
    %c0_i32 = arith.constant 0 : i32
    %c0_i32_0 = arith.constant 0 : i32
    %c0_i32_1 = arith.constant 0 : i32
    return %c0_i32, %c0_i32_0 : i32, i32
  }
  func.func @transform_6(%arg0: i32) -> (i32, i32) {
    %c0_i32 = arith.constant 0 : i32
    %c0_i32_0 = arith.constant 0 : i32
    %c0_i32_1 = arith.constant 0 : i32
    return %c0_i32, %c0_i32_0 : i32, i32
  }
  func.func @transform_7(%arg0: i32) -> (i32, i32) {
    %c0_i32 = arith.constant 0 : i32
    %c0_i32_0 = arith.constant 0 : i32
    %c0_i32_1 = arith.constant 0 : i32
    return %c0_i32, %c0_i32_0 : i32, i32
  }
  func.func @transform_8(%arg0: i32) -> (i32, i32) {
    %c0_i32 = arith.constant 0 : i32
    %c0_i32_0 = arith.constant 0 : i32
    %c0_i32_1 = arith.constant 0 : i32
    return %c0_i32, %c0_i32_0 : i32, i32
  }
  func.func @transform_9(%arg0: i32) -> (i32, i32) {
    %c0_i32 = arith.constant 0 : i32
    %c0_i32_0 = arith.constant 0 : i32
    %c0_i32_1 = arith.constant 0 : i32
    return %c0_i32, %c0_i32_0 : i32, i32
  }
  func.func @transform_10(%arg0: i32) -> (i32, i32) {
    %c0_i32 = arith.constant 0 : i32
    %c0_i32_0 = arith.constant 0 : i32
    return %arg0, %c0_i32 : i32, i32
  }
}

</mosaic_0001>

<llo_original>
// kernel: tpu_custom_call.1
$region0: #{tpu_custom_call.1}
  #allocation0 [shape = 'u32[]', space=smem, size = 0x4, offset = 0x4, fixed_abs, tag = 'smem constant byte address 0x4 - core index']
  #allocation1 [shape = 'u32[72,128]{1,0:T(1,128)}', space=vmem, size = 0x9000, scoped, tag = 'internal scratch']
  #allocation2 [shape = 'bf16[8,8,128]{2,1,0:T(8,128)(2,1)}', space=vmem, size = 0x4000, scoped, tag = 'scratch operand']
  %s0 = inlined_call_operand.vmem [shape: bf16[1,64,8], index: 0, kind: input, shape index: {}]
  %s1 = inlined_call_operand.vmem [shape: bf16[8,128], index: 1, kind: input, shape index: {}]
  %s2 = inlined_call_operand.hbm [shape: bf16[128,128], index: 2, kind: input, shape index: {}]
  %s3 = inlined_call_operand.vmem [shape: f32[1,128], index: 3, kind: input, shape index: {}]
  %s4 = inlined_call_operand.hbm [shape: bf16[256,128], index: 4, kind: input, shape index: {}]
  %s5 = inlined_call_operand.vmem [shape: f32[1,128], index: 5, kind: input, shape index: {}]
  %s6 = inlined_call_operand.vmem [shape: f32[1,128], index: 6, kind: input, shape index: {}]
  %s7 = inlined_call_operand.vmem [shape: f32[1,128], index: 7, kind: input, shape index: {}]
  %s8 = inlined_call_operand.hbm [shape: bf16[128,128], index: 8, kind: input, shape index: {}]
  %s9 = inlined_call_operand.vmem [shape: f32[1,128], index: 9, kind: input, shape index: {}]
  %s10 = inlined_call_operand.hbm [shape: f32[8,128], index: 10, kind: output, shape index: {}]
  %s11 = sld [smem:[#allocation0]]
  $region62: #{tpu_custom_call.1} parent=0
    _
  %s13 = ssub.s32 1, %s11
  %s14 = scalar_select 0, %s13, %s11
  $region1: #{tpu_custom_call.1} parent=0
    #allocation3 [shape = 'u8[32768]{0}', space=vmem, size = 0x8000, scoped, tag = 'input window, operand 2, single buffered']
    #allocation4 [shape = 's32[1]{0}', space=sflag, size = 0x4, scoped, tag = 'scoped memory for tpu_custom_call.1']
    #allocation5 [shape = 's32[1]{0}', space=sflag, size = 0x4, scoped, tag = 'scoped memory for tpu_custom_call.1']
    #allocation6 [shape = 'u8[65536]{0}', space=vmem, size = 0x10000, scoped, tag = 'input window, operand 4, single buffered']
    #allocation7 [shape = 's32[1]{0}', space=sflag, size = 0x4, scoped, tag = 'scoped memory for tpu_custom_call.1']
    #allocation8 [shape = 'u8[32768]{0}', space=vmem, size = 0x8000, scoped, tag = 'input window, operand 8, single buffered']
    #allocation9 [shape = 'u8[4096]{0}', space=vmem, size = 0x1000, scoped, tag = 'output window, operand 0, single buffered']
    %15 = vsyncpa [#allocation4], 0
    %16 = vsyncpa [#allocation7], 0
    %17 = vsyncpa [#allocation5], 0
    // Predicated region
    $region2: #{tpu_custom_call.1} parent=1 // pred_check
      _
    $region3: #{tpu_custom_call.1} parent=1 // pred_check_branch
      %19 = sbr.rel (0) target = $region5
    $region4: #{tpu_custom_call.1} parent=1 // pred_region
      _
    $region5: #{tpu_custom_call.1} parent=1 // pred_fallthru
      _
    // Predicated region
    $region6: #{tpu_custom_call.1} parent=1 // pred_check
      _
    $region7: #{tpu_custom_call.1} parent=1 // pred_check_branch
      %21 = sbr.rel (0) target = $region9
    $region8: #{tpu_custom_call.1} parent=1 // pred_region
      _
    $region9: #{tpu_custom_call.1} parent=1 // pred_fallthru
      _
    // Predicated region
    $region10: #{tpu_custom_call.1} parent=1 // pred_check
      _
    $region11: #{tpu_custom_call.1} parent=1 // pred_check_branch
      %23 = sbr.rel (0) target = $region13
    $region12: #{tpu_custom_call.1} parent=1 // pred_region
      %25 = vsyncadd [#allocation4], 0
      %s26 = sshll.u32 %s2, 4
      %s27 = int_to_ptr.hbm [resolvable:$true] %s26
      %s28 = sshll.u32 [#allocation3], 4
      %s29 = int_to_ptr.vmem [resolvable:$true] %s28
      %34 = dma.hbm_to_vmem [thread:$0]  %s27, 1024, %s29, [#allocation4], 64, 64, 4
    $region13: #{tpu_custom_call.1} parent=1 // pred_fallthru
      _
    // Predicated region
    $region14: #{tpu_custom_call.1} parent=1 // pred_check
      _
    $region15: #{tpu_custom_call.1} parent=1 // pred_check_branch
      %36 = sbr.rel (0) target = $region17
    $region16: #{tpu_custom_call.1} parent=1 // pred_region
      _
    $region17: #{tpu_custom_call.1} parent=1 // pred_fallthru
      _
    // Predicated region
    $region18: #{tpu_custom_call.1} parent=1 // pred_check
      _
    $region19: #{tpu_custom_call.1} parent=1 // pred_check_branch
      %38 = sbr.rel (0) target = $region21
    $region20: #{tpu_custom_call.1} parent=1 // pred_region
      %40 = vsyncadd [#allocation7], 0
      %s41 = sshll.u32 %s4, 4
      %s42 = int_to_ptr.hbm [resolvable:$true] %s41
      %s43 = sshll.u32 [#allocation6], 4
      %s44 = int_to_ptr.vmem [resolvable:$true] %s43
      %49 = dma.hbm_to_vmem [thread:$0]  %s42, 2048, %s44, [#allocation7], 64, 64, 4
    $region21: #{tpu_custom_call.1} parent=1 // pred_fallthru
      _
    // Predicated region
    $region22: #{tpu_custom_call.1} parent=1 // pred_check
      _
    $region23: #{tpu_custom_call.1} parent=1 // pred_check_branch
      %51 = sbr.rel (0) target = $region25
    $region24: #{tpu_custom_call.1} parent=1 // pred_region
      _
    $region25: #{tpu_custom_call.1} parent=1 // pred_fallthru
      _
    // Predicated region
    $region26: #{tpu_custom_call.1} parent=1 // pred_check
      _
    $region27: #{tpu_custom_call.1} parent=1 // pred_check_branch
      %53 = sbr.rel (0) target = $region29
    $region28: #{tpu_custom_call.1} parent=1 // pred_region
      _
    $region29: #{tpu_custom_call.1} parent=1 // pred_fallthru
      _
    // Predicated region
    $region30: #{tpu_custom_call.1} parent=1 // pred_check
      _
    $region31: #{tpu_custom_call.1} parent=1 // pred_check_branch
      %55 = sbr.rel (0) target = $region33
    $region32: #{tpu_custom_call.1} parent=1 // pred_region
      _
    $region33: #{tpu_custom_call.1} parent=1 // pred_fallthru
      _
    // Predicated region
    $region34: #{tpu_custom_call.1} parent=1 // pred_check
      _
    $region35: #{tpu_custom_call.1} parent=1 // pred_check_branch
      %57 = sbr.rel (0) target = $region37
    $region36: #{tpu_custom_call.1} parent=1 // pred_region
      %59 = vsyncadd [#allocation7], 0
      %s60 = sshll.u32 %s8, 4
      %s61 = int_to_ptr.hbm [resolvable:$true] %s60
      %s62 = sshll.u32 [#allocation8], 4
      %s63 = int_to_ptr.vmem [resolvable:$true] %s62
      %68 = dma.hbm_to_vmem [thread:$0]  %s61, 1024, %s63, [#allocation7], 64, 64, 4
    $region37: #{tpu_custom_call.1} parent=1 // pred_fallthru
      _
    // Predicated region
    $region38: #{tpu_custom_call.1} parent=1 // pred_check
      _
    $region39: #{tpu_custom_call.1} parent=1 // pred_check_branch
      %70 = sbr.rel (0) target = $region41
    $region40: #{tpu_custom_call.1} parent=1 // pred_region
      _
    $region41: #{tpu_custom_call.1} parent=1 // pred_fallthru
      _
    // Predicated region
    $region42: #{tpu_custom_call.1} parent=1 // pred_check
      _
    $region43: #{tpu_custom_call.1} parent=1 // pred_check_branch
      %72 = sbr.rel (0) target = $region45
    $region44: #{tpu_custom_call.1} parent=1 // pred_region
      %74 = dma.done [#allocation4], 1024
    $region45: #{tpu_custom_call.1} parent=1 // pred_fallthru
      _
    // Predicated region
    $region46: #{tpu_custom_call.1} parent=1 // pred_check
      _
    $region47: #{tpu_custom_call.1} parent=1 // pred_check_branch
      %76 = sbr.rel (0) target = $region49
    $region48: #{tpu_custom_call.1} parent=1 // pred_region
      %78 = dma.done [#allocation7], 2048
    $region49: #{tpu_custom_call.1} parent=1 // pred_fallthru
      _
    // Predicated region
    $region50: #{tpu_custom_call.1} parent=1 // pred_check
      _
    $region51: #{tpu_custom_call.1} parent=1 // pred_check_branch
      %80 = sbr.rel (0) target = $region53
    $region52: #{tpu_custom_call.1} parent=1 // pred_region
      %82 = dma.done [#allocation7], 1024
    $region53: #{tpu_custom_call.1} parent=1 // pred_fallthru
      _
    %v84 = vld [vmem:[%s0] sm:$0xf]
    %v85 = vld [vmem:[%s0 + $0x4] sm:$0xf]
    %v86 = vld [vmem:[%s0 + $0x8] sm:$0xf]
    %v87 = vld [vmem:[%s0 + $0xc] sm:$0xf]
    %v88 = vld [vmem:[%s0 + $0x10] sm:$0xf]
    %v89 = vld [vmem:[%s0 + $0x14] sm:$0xf]
    %v90 = vld [vmem:[%s0 + $0x18] sm:$0xf]
    %v91 = vld [vmem:[%s0 + $0x1c] sm:$0xf]
    %v92 = vld [vmem:[%s1] sm:$0xf]
    %v93 = vld [vmem:[%s3] sm:$0x1]
    %v95 = vperm.slane %v93, 0
    %v105 = vunpack.c.l.b16 %v84
    %v106 = vunpack.c.l.b16 %v85
    %v107 = vunpack.c.l.b16 %v86
    %v108 = vunpack.c.l.b16 %v87
    %v109 = vunpack.c.l.b16 %v88
    %v110 = vunpack.c.l.b16 %v89
    %v111 = vunpack.c.l.b16 %v90
    %v112 = vunpack.c.l.b16 %v91
    %v113 = vpack.c.b16 %v106, %v105
    %v114 = vpack.c.b16 %v108, %v107
    %v115 = vpack.c.b16 %v110, %v109
    %v116 = vpack.c.b16 %v112, %v111
    %vm117 = vcmask 64512
    %v119 = vsel %vm117, %v113, 0
    %v122 = vsel %vm117, %v114, 0
    %v125 = vsel %vm117, %v115, 0
    %v128 = vsel %vm117, %v116, 0
    %vm130 = vcmask 1043456
    %v132 = vsel %vm130, %v92, 0
    %134 = vmatpush.bf16.msra.mxu0 0
    %135 = vmatpush.bf16.msra.mxu0 0
    %136 = vmatpush.bf16.msra.mxu0 0
    %137 = vmatpush.bf16.msra.mxu0 0
    %138 = vmatpush.bf16.msra.mxu0 0
    %139 = vmatpush.bf16.msra.mxu0 0
    %140 = vmatpush.bf16.msra.mxu0 0
    %141 = vmatpush.bf16.msra.mxu0 %v132
    %142 = vmatmul.bf16.gmra.mxu0 %v119
    %v143 = vpop.f32.mrf.mxu0
    %v144 = vadd.f32 %v95, %v143
    %v145 = vpop.f32.mrf.mxu0
    %v146 = vadd.f32 %v95, %v145
    %147 = vmatmul.bf16.gmra.mxu0 %v122
    %v148 = vpop.f32.mrf.mxu0
    %v149 = vadd.f32 %v95, %v148
    %v150 = vpop.f32.mrf.mxu0
    %v151 = vadd.f32 %v95, %v150
    %152 = vmatmul.bf16.gmra.mxu0 %v125
    %v153 = vpop.f32.mrf.mxu0
    %v154 = vadd.f32 %v95, %v153
    %v155 = vpop.f32.mrf.mxu0
    %v156 = vadd.f32 %v95, %v155
    %157 = vmatmul.bf16.gmra.mxu0 %v128
    %v158 = vpop.f32.mrf.mxu0
    %v159 = vadd.f32 %v95, %v158
    %v160 = vpop.f32.mrf.mxu0
    %v161 = vadd.f32 %v95, %v160
    %162 = vdwg.mxu0
    %v163 = vpack.c.bf16 %v144, %v144
    %164 = vst [vmem:[#allocation2] sm:$0xf] %v163
    %v165 = vpack.c.bf16 %v146, %v146
    %s166 = scalar_lea.vmem [#allocation2], 4
    %167 = vst [vmem:[%s166] sm:$0xf] %v165
    %v168 = vpack.c.bf16 %v149, %v149
    %s169 = scalar_lea.vmem [#allocation2], 8
    %170 = vst [vmem:[%s169] sm:$0xf] %v168
    %v171 = vpack.c.bf16 %v151, %v151
    %s172 = scalar_lea.vmem [#allocation2], 12
    %173 = vst [vmem:[%s172] sm:$0xf] %v171
    %v174 = vpack.c.bf16 %v154, %v154
    %s175 = scalar_lea.vmem [#allocation2], 16
    %176 = vst [vmem:[%s175] sm:$0xf] %v174
    %v177 = vpack.c.bf16 %v156, %v156
    %s178 = scalar_lea.vmem [#allocation2], 20
    %179 = vst [vmem:[%s178] sm:$0xf] %v177
    %v180 = vpack.c.bf16 %v159, %v159
    %s181 = scalar_lea.vmem [#allocation2], 24
    %182 = vst [vmem:[%s181] sm:$0xf] %v180
    %v183 = vpack.c.bf16 %v161, %v161
    %s184 = scalar_lea.vmem [#allocation2], 28
    %185 = vst [vmem:[%s184] sm:$0xf] %v183
    %v186 = vld [vmem:[#allocation3] sm:$0xf]
    %v187 = vld [vmem:[#allocation3 + $0x4] sm:$0xf]
    %v188 = vld [vmem:[#allocation3 + $0x8] sm:$0xf]
    %v189 = vld [vmem:[#allocation3 + $0xc] sm:$0xf]
    %v190 = vld [vmem:[#allocation3 + $0x10] sm:$0xf]
    %v191 = vld [vmem:[#allocation3 + $0x14] sm:$0xf]
    %v192 = vld [vmem:[#allocation3 + $0x18] sm:$0xf]
    %v193 = vld [vmem:[#allocation3 + $0x1c] sm:$0xf]
    %v194 = vld [vmem:[#allocation3 + $0x20] sm:$0xf]
    %v195 = vld [vmem:[#allocation3 + $0x24] sm:$0xf]
    %v196 = vld [vmem:[#allocation3 + $0x28] sm:$0xf]
    %v197 = vld [vmem:[#allocation3 + $0x2c] sm:$0xf]
    %v198 = vld [vmem:[#allocation3 + $0x30] sm:$0xf]
    %v199 = vld [vmem:[#allocation3 + $0x34] sm:$0xf]
    %v200 = vld [vmem:[#allocation3 + $0x38] sm:$0xf]
    %v201 = vld [vmem:[#allocation3 + $0x3c] sm:$0xf]
    %v202 = vld [vmem:[#allocation6] sm:$0xf]
    %v203 = vld [vmem:[#allocation6 + $0x4] sm:$0xf]
    %v204 = vld [vmem:[#allocation6 + $0x8] sm:$0xf]
    %v205 = vld [vmem:[#allocation6 + $0xc] sm:$0xf]
    %v206 = vld [vmem:[#allocation6 + $0x10] sm:$0xf]
    %v207 = vld [vmem:[#allocation6 + $0x14] sm:$0xf]
    %v208 = vld [vmem:[#allocation6 + $0x18] sm:$0xf]
    %v209 = vld [vmem:[#allocation6 + $0x1c] sm:$0xf]
    %v210 = vld [vmem:[#allocation6 + $0x20] sm:$0xf]
    %v211 = vld [vmem:[#allocation6 + $0x24] sm:$0xf]
    %v212 = vld [vmem:[#allocation6 + $0x28] sm:$0xf]
    %v213 = vld [vmem:[#allocation6 + $0x2c] sm:$0xf]
    %v214 = vld [vmem:[#allocation6 + $0x30] sm:$0xf]
    %v215 = vld [vmem:[#allocation6 + $0x34] sm:$0xf]
    %v216 = vld [vmem:[#allocation6 + $0x38] sm:$0xf]
    %v217 = vld [vmem:[#allocation6 + $0x3c] sm:$0xf]
    %v218 = vld [vmem:[#allocation6 + $0x40] sm:$0xf]
    %v219 = vld [vmem:[#allocation6 + $0x44] sm:$0xf]
    %v220 = vld [vmem:[#allocation6 + $0x48] sm:$0xf]
    %v221 = vld [vmem:[#allocation6 + $0x4c] sm:$0xf]
    %v222 = vld [vmem:[#allocation6 + $0x50] sm:$0xf]
    %v223 = vld [vmem:[#allocation6 + $0x54] sm:$0xf]
    %v224 = vld [vmem:[#allocation6 + $0x58] sm:$0xf]
    %v225 = vld [vmem:[#allocation6 + $0x5c] sm:$0xf]
    %v226 = vld [vmem:[#allocation6 + $0x60] sm:$0xf]
    %v227 = vld [vmem:[#allocation6 + $0x64] sm:$0xf]
    %v228 = vld [vmem:[#allocation6 + $0x68] sm:$0xf]
    %v229 = vld [vmem:[#allocation6 + $0x6c] sm:$0xf]
    %v230 = vld [vmem:[#allocation6 + $0x70] sm:$0xf]
    %v231 = vld [vmem:[#allocation6 + $0x74] sm:$0xf]
    %v232 = vld [vmem:[#allocation6 + $0x78] sm:$0xf]
    %v233 = vld [vmem:[#allocation6 + $0x7c] sm:$0xf]
    %v234 = vld [vmem:[%s5] sm:$0x1]
    %v236 = vperm.slane %v234, 0
    %v238 = vld [vmem:[#allocation2] sm:$0xf]
    %v239 = vunpack.c.l.bf16 %v238
    %v240 = vtanh.pop %v239
    %v241 = vpack.c.bf16 %v240, %v240
    %v242 = vld [vmem:[%s166] sm:$0xf]
    %v243 = vunpack.c.l.bf16 %v242
    %v260 = vunpack.c.l.b16 %v186
    %v261 = vunpack.c.l.b16 %v187
    %v262 = vunpack.c.l.b16 %v188
    %v263 = vunpack.c.l.b16 %v189
    %v264 = vunpack.c.l.b16 %v190
    %v265 = vunpack.c.l.b16 %v191
    %v266 = vunpack.c.l.b16 %v192
    %v267 = vunpack.c.l.b16 %v193
    %v268 = vunpack.c.l.b16 %v194
    %v269 = vunpack.c.l.b16 %v195
    %v270 = vunpack.c.l.b16 %v196
    %v271 = vunpack.c.l.b16 %v197
    %v272 = vunpack.c.l.b16 %v198
    %v273 = vunpack.c.l.b16 %v199
    %v274 = vunpack.c.l.b16 %v200
    %v275 = vunpack.c.l.b16 %v201
    %v276 = vpack.c.b16 %v261, %v260
    %v277 = vpack.c.b16 %v263, %v262
    %v278 = vpack.c.b16 %v265, %v264
    %v279 = vpack.c.b16 %v267, %v266
    %v280 = vpack.c.b16 %v269, %v268
    %v281 = vpack.c.b16 %v271, %v270
    %v282 = vpack.c.b16 %v273, %v272
    %v283 = vpack.c.b16 %v275, %v274
    %292 = vmatpush.bf16.msra.mxu0 %v283
    %293 = vmatpush.bf16.msra.mxu0 %v282
    %294 = vmatpush.bf16.msra.mxu0 %v281
    %295 = vmatpush.bf16.msra.mxu0 %v280
    %296 = vmatpush.bf16.msra.mxu0 %v279
    %297 = vmatpush.bf16.msra.mxu0 %v278
    %298 = vmatpush.bf16.msra.mxu0 %v277
    %299 = vmatpush.bf16.msra.mxu0 %v276
    %300 = vmatmul.bf16.gmra.mxu0 %v241
    %v301 = vpop.f32.mrf.mxu0
    %v302 = vadd.f32 0.0, %v301
    %v303 = vpop.f32.mrf.mxu0
    %304 = vdwg.mxu0
    %v305 = vadd.f32 %v243, %v302
    %v306 = vtanh.pop %v305
    %v307 = vpack.c.bf16 %v306, %v306
    %v340 = vunpack.c.l.b16 %v202
    %v341 = vunpack.c.l.b16 %v203
    %v342 = vunpack.c.l.b16 %v204
    %v343 = vunpack.c.l.b16 %v205
    %v344 = vunpack.c.l.b16 %v206
    %v345 = vunpack.c.l.b16 %v207
    %v346 = vunpack.c.l.b16 %v208
    %v347 = vunpack.c.l.b16 %v209
    %v348 = vunpack.c.l.b16 %v210
    %v349 = vunpack.c.l.b16 %v211
    %v350 = vunpack.c.l.b16 %v212
    %v351 = vunpack.c.l.b16 %v213
    %v352 = vunpack.c.l.b16 %v214
    %v353 = vunpack.c.l.b16 %v215
    %v354 = vunpack.c.l.b16 %v216
    %v355 = vunpack.c.l.b16 %v217
    %v356 = vunpack.c.l.b16 %v218
    %v357 = vunpack.c.l.b16 %v219
    %v358 = vunpack.c.l.b16 %v220
    %v359 = vunpack.c.l.b16 %v221
    %v360 = vunpack.c.l.b16 %v222
    %v361 = vunpack.c.l.b16 %v223
    %v362 = vunpack.c.l.b16 %v224
    %v363 = vunpack.c.l.b16 %v225
    %v364 = vunpack.c.l.b16 %v226
    %v365 = vunpack.c.l.b16 %v227
    %v366 = vunpack.c.l.b16 %v228
    %v367 = vunpack.c.l.b16 %v229
    %v368 = vunpack.c.l.b16 %v230
    %v369 = vunpack.c.l.b16 %v231
    %v370 = vunpack.c.l.b16 %v232
    %v371 = vunpack.c.l.b16 %v233
    %v372 = vpack.c.b16 %v341, %v340
    %v373 = vpack.c.b16 %v343, %v342
    %v374 = vpack.c.b16 %v345, %v344
    %v375 = vpack.c.b16 %v347, %v346
    %v376 = vpack.c.b16 %v349, %v348
    %v377 = vpack.c.b16 %v351, %v350
    %v378 = vpack.c.b16 %v353, %v352
    %v379 = vpack.c.b16 %v355, %v354
    %v380 = vpack.c.b16 %v357, %v356
    %v381 = vpack.c.b16 %v359, %v358
    %v382 = vpack.c.b16 %v361, %v360
    %v383 = vpack.c.b16 %v363, %v362
    %v384 = vpack.c.b16 %v365, %v364
    %v385 = vpack.c.b16 %v367, %v366
    %v386 = vpack.c.b16 %v369, %v368
    %v387 = vpack.c.b16 %v371, %v370
    %404 = vmatpush.bf16.msra.mxu0 %v379
    %405 = vmatpush.bf16.msra.mxu0 %v378
    %406 = vmatpush.bf16.msra.mxu0 %v377
    %407 = vmatpush.bf16.msra.mxu0 %v376
    %408 = vmatpush.bf16.msra.mxu0 %v375
    %409 = vmatpush.bf16.msra.mxu0 %v374
    %410 = vmatpush.bf16.msra.mxu0 %v373
    %411 = vmatpush.bf16.msra.mxu0 %v372
    %412 = vmatmul.bf16.gmra.mxu0 %v241
    %v413 = vpop.f32.mrf.mxu0
    %v414 = vadd.f32 %v236, %v413
    %v415 = vpop.f32.mrf.mxu0
    %416 = vdwg.mxu0
    %417 = vmatpush.bf16.msra.mxu0 %v387
    %418 = vmatpush.bf16.msra.mxu0 %v386
    %419 = vmatpush.bf16.msra.mxu0 %v385
    %420 = vmatpush.bf16.msra.mxu0 %v384
    %421 = vmatpush.bf16.msra.mxu0 %v383
    %422 = vmatpush.bf16.msra.mxu0 %v382
    %423 = vmatpush.bf16.msra.mxu0 %v381
    %424 = vmatpush.bf16.msra.mxu0 %v380
    %425 = vmatmul.bf16.gmra.mxu0 0
    %v426 = vpop.f32.mrf.mxu0
    %v427 = vadd.f32 %v414, %v426
    %v428 = vpop.f32.mrf.mxu0
    %429 = vdwg.mxu0
    %v430 = vtanh.pop %v427
    %v431 = vpack.c.bf16 %v430, %v430
    %v432 = vld [vmem:[%s169] sm:$0xf]
    %v433 = vunpack.c.l.bf16 %v432
    %434 = vmatpush.bf16.msra.mxu0 %v283
    %435 = vmatpush.bf16.msra.mxu0 %v282
    %436 = vmatpush.bf16.msra.mxu0 %v281
    %437 = vmatpush.bf16.msra.mxu0 %v280
    %438 = vmatpush.bf16.msra.mxu0 %v279
    %439 = vmatpush.bf16.msra.mxu0 %v278
    %440 = vmatpush.bf16.msra.mxu0 %v277
    %441 = vmatpush.bf16.msra.mxu0 %v276
    %442 = vmatmul.bf16.gmra.mxu0 %v307
    %v443 = vpop.f32.mrf.mxu0
    %v444 = vadd.f32 0.0, %v443
    %v445 = vpop.f32.mrf.mxu0
    %446 = vdwg.mxu0
    %v447 = vadd.f32 %v433, %v444
    %v448 = vtanh.pop %v447
    %v449 = vpack.c.bf16 %v448, %v448
    %450 = vmatpush.bf16.msra.mxu0 %v379
    %451 = vmatpush.bf16.msra.mxu0 %v378
    %452 = vmatpush.bf16.msra.mxu0 %v377
    %453 = vmatpush.bf16.msra.mxu0 %v376
    %454 = vmatpush.bf16.msra.mxu0 %v375
    %455 = vmatpush.bf16.msra.mxu0 %v374
    %456 = vmatpush.bf16.msra.mxu0 %v373
    %457 = vmatpush.bf16.msra.mxu0 %v372
    %458 = vmatmul.bf16.gmra.mxu0 %v307
    %v459 = vpop.f32.mrf.mxu0
    %v460 = vadd.f32 %v236, %v459
    %v461 = vpop.f32.mrf.mxu0
    %462 = vdwg.mxu0
    %463 = vmatpush.bf16.msra.mxu0 %v387
    %464 = vmatpush.bf16.msra.mxu0 %v386
    %465 = vmatpush.bf16.msra.mxu0 %v385
    %466 = vmatpush.bf16.msra.mxu0 %v384
    %467 = vmatpush.bf16.msra.mxu0 %v383
    %468 = vmatpush.bf16.msra.mxu0 %v382
    %469 = vmatpush.bf16.msra.mxu0 %v381
    %470 = vmatpush.bf16.msra.mxu0 %v380
    %471 = vmatmul.bf16.gmra.mxu0 %v431
    %v472 = vpop.f32.mrf.mxu0
    %v473 = vadd.f32 %v460, %v472
    %v474 = vpop.f32.mrf.mxu0
    %475 = vdwg.mxu0
    %v476 = vtanh.pop %v473
    %v477 = vpack.c.bf16 %v476, %v476
    %v478 = vld [vmem:[%s172] sm:$0xf]
    %v479 = vunpack.c.l.bf16 %v478
    %480 = vmatpush.bf16.msra.mxu0 %v283
    %481 = vmatpush.bf16.msra.mxu0 %v282
    %482 = vmatpush.bf16.msra.mxu0 %v281
    %483 = vmatpush.bf16.msra.mxu0 %v280
    %484 = vmatpush.bf16.msra.mxu0 %v279
    %485 = vmatpush.bf16.msra.mxu0 %v278
    %486 = vmatpush.bf16.msra.mxu0 %v277
    %487 = vmatpush.bf16.msra.mxu0 %v276
    %488 = vmatmul.bf16.gmra.mxu0 %v449
    %v489 = vpop.f32.mrf.mxu0
    %v490 = vadd.f32 0.0, %v489
    %v491 = vpop.f32.mrf.mxu0
    %492 = vdwg.mxu0
    %v493 = vadd.f32 %v479, %v490
    %v494 = vtanh.pop %v493
    %v495 = vpack.c.bf16 %v494, %v494
    %496 = vmatpush.bf16.msra.mxu0 %v379
    %497 = vmatpush.bf16.msra.mxu0 %v378
    %498 = vmatpush.bf16.msra.mxu0 %v377
    %499 = vmatpush.bf16.msra.mxu0 %v376
    %500 = vmatpush.bf16.msra.mxu0 %v375
    %501 = vmatpush.bf16.msra.mxu0 %v374
    %502 = vmatpush.bf16.msra.mxu0 %v373
    %503 = vmatpush.bf16.msra.mxu0 %v372
    %504 = vmatmul.bf16.gmra.mxu0 %v449
    %v505 = vpop.f32.mrf.mxu0
    %v506 = vadd.f32 %v236, %v505
    %v507 = vpop.f32.mrf.mxu0
    %508 = vdwg.mxu0
    %509 = vmatpush.bf16.msra.mxu0 %v387
    %510 = vmatpush.bf16.msra.mxu0 %v386
    %511 = vmatpush.bf16.msra.mxu0 %v385
    %512 = vmatpush.bf16.msra.mxu0 %v384
    %513 = vmatpush.bf16.msra.mxu0 %v383
    %514 = vmatpush.bf16.msra.mxu0 %v382
    %515 = vmatpush.bf16.msra.mxu0 %v381
    %516 = vmatpush.bf16.msra.mxu0 %v380
    %517 = vmatmul.bf16.gmra.mxu0 %v477
    %v518 = vpop.f32.mrf.mxu0
    %v519 = vadd.f32 %v506, %v518
    %v520 = vpop.f32.mrf.mxu0
    %521 = vdwg.mxu0
    %v522 = vtanh.pop %v519
    %v523 = vpack.c.bf16 %v522, %v522
    %v524 = vld [vmem:[%s175] sm:$0xf]
    %v525 = vunpack.c.l.bf16 %v524
    %526 = vmatpush.bf16.msra.mxu0 %v283
    %527 = vmatpush.bf16.msra.mxu0 %v282
    %528 = vmatpush.bf16.msra.mxu0 %v281
    %529 = vmatpush.bf16.msra.mxu0 %v280
    %530 = vmatpush.bf16.msra.mxu0 %v279
    %531 = vmatpush.bf16.msra.mxu0 %v278
    %532 = vmatpush.bf16.msra.mxu0 %v277
    %533 = vmatpush.bf16.msra.mxu0 %v276
    %534 = vmatmul.bf16.gmra.mxu0 %v495
    %v535 = vpop.f32.mrf.mxu0
    %v536 = vadd.f32 0.0, %v535
    %v537 = vpop.f32.mrf.mxu0
    %538 = vdwg.mxu0
    %v539 = vadd.f32 %v525, %v536
    %v540 = vtanh.pop %v539
    %v541 = vpack.c.bf16 %v540, %v540
    %542 = vmatpush.bf16.msra.mxu0 %v379
    %543 = vmatpush.bf16.msra.mxu0 %v378
    %544 = vmatpush.bf16.msra.mxu0 %v377
    %545 = vmatpush.bf16.msra.mxu0 %v376
    %546 = vmatpush.bf16.msra.mxu0 %v375
    %547 = vmatpush.bf16.msra.mxu0 %v374
    %548 = vmatpush.bf16.msra.mxu0 %v373
    %549 = vmatpush.bf16.msra.mxu0 %v372
    %550 = vmatmul.bf16.gmra.mxu0 %v495
    %v551 = vpop.f32.mrf.mxu0
    %v552 = vadd.f32 %v236, %v551
    %v553 = vpop.f32.mrf.mxu0
    %554 = vdwg.mxu0
    %555 = vmatpush.bf16.msra.mxu0 %v387
    %556 = vmatpush.bf16.msra.mxu0 %v386
    %557 = vmatpush.bf16.msra.mxu0 %v385
    %558 = vmatpush.bf16.msra.mxu0 %v384
    %559 = vmatpush.bf16.msra.mxu0 %v383
    %560 = vmatpush.bf16.msra.mxu0 %v382
    %561 = vmatpush.bf16.msra.mxu0 %v381
    %562 = vmatpush.bf16.msra.mxu0 %v380
    %563 = vmatmul.bf16.gmra.mxu0 %v523
    %v564 = vpop.f32.mrf.mxu0
    %v565 = vadd.f32 %v552, %v564
    %v566 = vpop.f32.mrf.mxu0
    %567 = vdwg.mxu0
    %v568 = vtanh.pop %v565
    %v569 = vpack.c.bf16 %v568, %v568
    %v570 = vld [vmem:[%s178] sm:$0xf]
    %v571 = vunpack.c.l.bf16 %v570
    %572 = vmatpush.bf16.msra.mxu0 %v283
    %573 = vmatpush.bf16.msra.mxu0 %v282
    %574 = vmatpush.bf16.msra.mxu0 %v281
    %575 = vmatpush.bf16.msra.mxu0 %v280
    %576 = vmatpush.bf16.msra.mxu0 %v279
    %577 = vmatpush.bf16.msra.mxu0 %v278
    %578 = vmatpush.bf16.msra.mxu0 %v277
    %579 = vmatpush.bf16.msra.mxu0 %v276
    %580 = vmatmul.bf16.gmra.mxu0 %v541
    %v581 = vpop.f32.mrf.mxu0
    %v582 = vadd.f32 0.0, %v581
    %v583 = vpop.f32.mrf.mxu0
    %584 = vdwg.mxu0
    %v585 = vadd.f32 %v571, %v582
    %v586 = vtanh.pop %v585
    %v587 = vpack.c.bf16 %v586, %v586
    %588 = vmatpush.bf16.msra.mxu0 %v379
    %589 = vmatpush.bf16.msra.mxu0 %v378
    %590 = vmatpush.bf16.msra.mxu0 %v377
    %591 = vmatpush.bf16.msra.mxu0 %v376
    %592 = vmatpush.bf16.msra.mxu0 %v375
    %593 = vmatpush.bf16.msra.mxu0 %v374
    %594 = vmatpush.bf16.msra.mxu0 %v373
    %595 = vmatpush.bf16.msra.mxu0 %v372
    %596 = vmatmul.bf16.gmra.mxu0 %v541
    %v597 = vpop.f32.mrf.mxu0
    %v598 = vadd.f32 %v236, %v597
    %v599 = vpop.f32.mrf.mxu0
    %600 = vdwg.mxu0
    %601 = vmatpush.bf16.msra.mxu0 %v387
    %602 = vmatpush.bf16.msra.mxu0 %v386
    %603 = vmatpush.bf16.msra.mxu0 %v385
    %604 = vmatpush.bf16.msra.mxu0 %v384
    %605 = vmatpush.bf16.msra.mxu0 %v383
    %606 = vmatpush.bf16.msra.mxu0 %v382
    %607 = vmatpush.bf16.msra.mxu0 %v381
    %608 = vmatpush.bf16.msra.mxu0 %v380
    %609 = vmatmul.bf16.gmra.mxu0 %v569
    %v610 = vpop.f32.mrf.mxu0
    %v611 = vadd.f32 %v598, %v610
    %v612 = vpop.f32.mrf.mxu0
    %613 = vdwg.mxu0
    %v614 = vtanh.pop %v611
    %v615 = vpack.c.bf16 %v614, %v614
    %v616 = vld [vmem:[%s181] sm:$0xf]
    %v617 = vunpack.c.l.bf16 %v616
    %618 = vmatpush.bf16.msra.mxu0 %v283
    %619 = vmatpush.bf16.msra.mxu0 %v282
    %620 = vmatpush.bf16.msra.mxu0 %v281
    %621 = vmatpush.bf16.msra.mxu0 %v280
    %622 = vmatpush.bf16.msra.mxu0 %v279
    %623 = vmatpush.bf16.msra.mxu0 %v278
    %624 = vmatpush.bf16.msra.mxu0 %v277
    %625 = vmatpush.bf16.msra.mxu0 %v276
    %626 = vmatmul.bf16.gmra.mxu0 %v587
    %v627 = vpop.f32.mrf.mxu0
    %v628 = vadd.f32 0.0, %v627
    %v629 = vpop.f32.mrf.mxu0
    %630 = vdwg.mxu0
    %v631 = vadd.f32 %v617, %v628
    %v632 = vtanh.pop %v631
    %v633 = vpack.c.bf16 %v632, %v632
    %634 = vmatpush.bf16.msra.mxu0 %v379
    %635 = vmatpush.bf16.msra.mxu0 %v378
    %636 = vmatpush.bf16.msra.mxu0 %v377
    %637 = vmatpush.bf16.msra.mxu0 %v376
    %638 = vmatpush.bf16.msra.mxu0 %v375
    %639 = vmatpush.bf16.msra.mxu0 %v374
    %640 = vmatpush.bf16.msra.mxu0 %v373
    %641 = vmatpush.bf16.msra.mxu0 %v372
    %642 = vmatmul.bf16.gmra.mxu0 %v587
    %v643 = vpop.f32.mrf.mxu0
    %v644 = vadd.f32 %v236, %v643
    %v645 = vpop.f32.mrf.mxu0
    %646 = vdwg.mxu0
    %647 = vmatpush.bf16.msra.mxu0 %v387
    %648 = vmatpush.bf16.msra.mxu0 %v386
    %649 = vmatpush.bf16.msra.mxu0 %v385
    %650 = vmatpush.bf16.msra.mxu0 %v384
    %651 = vmatpush.bf16.msra.mxu0 %v383
    %652 = vmatpush.bf16.msra.mxu0 %v382
    %653 = vmatpush.bf16.msra.mxu0 %v381
    %654 = vmatpush.bf16.msra.mxu0 %v380
    %655 = vmatmul.bf16.gmra.mxu0 %v615
    %v656 = vpop.f32.mrf.mxu0
    %v657 = vadd.f32 %v644, %v656
    %v658 = vpop.f32.mrf.mxu0
    %659 = vdwg.mxu0
    %v660 = vtanh.pop %v657
    %v661 = vpack.c.bf16 %v660, %v660
    %v662 = vld [vmem:[%s184] sm:$0xf]
    %v663 = vunpack.c.l.bf16 %v662
    %664 = vmatpush.bf16.msra.mxu0 %v283
    %665 = vmatpush.bf16.msra.mxu0 %v282
    %666 = vmatpush.bf16.msra.mxu0 %v281
    %667 = vmatpush.bf16.msra.mxu0 %v280
    %668 = vmatpush.bf16.msra.mxu0 %v279
    %669 = vmatpush.bf16.msra.mxu0 %v278
    %670 = vmatpush.bf16.msra.mxu0 %v277
    %671 = vmatpush.bf16.msra.mxu0 %v276
    %672 = vmatmul.bf16.gmra.mxu0 %v633
    %v673 = vpop.f32.mrf.mxu0
    %v674 = vadd.f32 0.0, %v673
    %v675 = vpop.f32.mrf.mxu0
    %676 = vdwg.mxu0
    %v677 = vadd.f32 %v663, %v674
    %v678 = vtanh.pop %v677
    %v679 = vpack.c.bf16 %v678, %v678
    %680 = vmatpush.bf16.msra.mxu0 %v379
    %681 = vmatpush.bf16.msra.mxu0 %v378
    %682 = vmatpush.bf16.msra.mxu0 %v377
    %683 = vmatpush.bf16.msra.mxu0 %v376
    %684 = vmatpush.bf16.msra.mxu0 %v375
    %685 = vmatpush.bf16.msra.mxu0 %v374
    %686 = vmatpush.bf16.msra.mxu0 %v373
    %687 = vmatpush.bf16.msra.mxu0 %v372
    %688 = vmatmul.bf16.gmra.mxu0 %v633
    %v689 = vpop.f32.mrf.mxu0
    %v690 = vadd.f32 %v236, %v689
    %v691 = vpop.f32.mrf.mxu0
    %692 = vdwg.mxu0
    %693 = vmatpush.bf16.msra.mxu0 %v387
    %694 = vmatpush.bf16.msra.mxu0 %v386
    %695 = vmatpush.bf16.msra.mxu0 %v385
    %696 = vmatpush.bf16.msra.mxu0 %v384
    %697 = vmatpush.bf16.msra.mxu0 %v383
    %698 = vmatpush.bf16.msra.mxu0 %v382
    %699 = vmatpush.bf16.msra.mxu0 %v381
    %700 = vmatpush.bf16.msra.mxu0 %v380
    %701 = vmatmul.bf16.gmra.mxu0 %v661
    %v702 = vpop.f32.mrf.mxu0
    %v703 = vadd.f32 %v690, %v702
    %v704 = vpop.f32.mrf.mxu0
    %705 = vdwg.mxu0
    %v706 = vtanh.pop %v703
    %v707 = vpack.c.bf16 %v706, %v706
    %708 = vmatpush.bf16.msra.mxu0 %v379
    %709 = vmatpush.bf16.msra.mxu0 %v378
    %710 = vmatpush.bf16.msra.mxu0 %v377
    %711 = vmatpush.bf16.msra.mxu0 %v376
    %712 = vmatpush.bf16.msra.mxu0 %v375
    %713 = vmatpush.bf16.msra.mxu0 %v374
    %714 = vmatpush.bf16.msra.mxu0 %v373
    %715 = vmatpush.bf16.msra.mxu0 %v372
    %716 = vmatmul.bf16.gmra.mxu0 %v679
    %v717 = vpop.f32.mrf.mxu0
    %v718 = vadd.f32 %v236, %v717
    %v719 = vpop.f32.mrf.mxu0
    %720 = vdwg.mxu0
    %721 = vmatpush.bf16.msra.mxu0 %v387
    %722 = vmatpush.bf16.msra.mxu0 %v386
    %723 = vmatpush.bf16.msra.mxu0 %v385
    %724 = vmatpush.bf16.msra.mxu0 %v384
    %725 = vmatpush.bf16.msra.mxu0 %v383
    %726 = vmatpush.bf16.msra.mxu0 %v382
    %727 = vmatpush.bf16.msra.mxu0 %v381
    %728 = vmatpush.bf16.msra.mxu0 %v380
    %729 = vmatmul.bf16.gmra.mxu0 %v707
    %v730 = vpop.f32.mrf.mxu0
    %v731 = vadd.f32 %v718, %v730
    %v732 = vpop.f32.mrf.mxu0
    %733 = vdwg.mxu0
    %v734 = vtanh.pop %v731
    %735 = vadd.xlane.f32.xlu0 %v734
    %v736 = vpop.xlane.xlu0 %735
    %v737 = vmul.f32 %v736, 0.03125
    %v738 = vmul.f32 %v734, %v734
    %739 = vadd.xlane.f32.xlu0 %v738
    %v740 = vpop.xlane.xlu0 %739
    %v741 = vmul.f32 %v740, 0.03125
    %v742 = vmul.f32 %v737, %v737
    %v743 = vsub.f32 %v741, %v742
    %v744 = vmax.f32 %v743, 0.0
    %v745 = vsub.f32 %v734, %v737
    %v746 = vadd.f32 %v744, 1e-05
    %v747 = vrsqrt.pop %v746
    %v748 = vmul.f32 %v747, %v746
    %v749 = vmul.f32 %v748, %v747
    %v750 = vmul.f32 0.5, %v749
    %v751 = vsub.f32 1.5, %v750
    %v752 = vmul.f32 %v747, %v751
    %vm753 = vweird.f32 %v746
    %vm754 = vweird.f32 %v747
    %vm755 = vmor %vm753, %vm754
    %v756 = vsel %vm755, %v747, %v752
    %v757 = vmul.f32 %v745, %v756
    %v758 = vld [vmem:[%s6] sm:$0x1]
    %v760 = vperm.slane %v758, 0
    %v762 = vmul.f32 %v757, %v760
    %v763 = vld [vmem:[%s7] sm:$0x1]
    %v765 = vperm.slane %v763, 0
    %v767 = vadd.f32 %v762, %v765
    %v768 = vpack.c.bf16 %v767, %v767
    %v769 = vld [vmem:[#allocation8] sm:$0xf]
    %v770 = vld [vmem:[#allocation8 + $0x4] sm:$0xf]
    %v771 = vld [vmem:[#allocation8 + $0x8] sm:$0xf]
    %v772 = vld [vmem:[#allocation8 + $0xc] sm:$0xf]
    %v773 = vld [vmem:[#allocation8 + $0x10] sm:$0xf]
    %v774 = vld [vmem:[#allocation8 + $0x14] sm:$0xf]
    %v775 = vld [vmem:[#allocation8 + $0x18] sm:$0xf]
    %v776 = vld [vmem:[#allocation8 + $0x1c] sm:$0xf]
    %v777 = vld [vmem:[#allocation8 + $0x20] sm:$0xf]
    %v778 = vld [vmem:[#allocation8 + $0x24] sm:$0xf]
    %v779 = vld [vmem:[#allocation8 + $0x28] sm:$0xf]
    %v780 = vld [vmem:[#allocation8 + $0x2c] sm:$0xf]
    %v781 = vld [vmem:[#allocation8 + $0x30] sm:$0xf]
    %v782 = vld [vmem:[#allocation8 + $0x34] sm:$0xf]
    %v783 = vld [vmem:[#allocation8 + $0x38] sm:$0xf]
    %v784 = vld [vmem:[#allocation8 + $0x3c] sm:$0xf]
    %v785 = vld [vmem:[%s9] sm:$0x1]
    %v787 = vperm.slane %v785, 0
    %v805 = vunpack.c.l.b16 %v769
    %v806 = vunpack.c.l.b16 %v770
    %v807 = vunpack.c.l.b16 %v771
    %v808 = vunpack.c.l.b16 %v772
    %v809 = vunpack.c.l.b16 %v773
    %v810 = vunpack.c.l.b16 %v774
    %v811 = vunpack.c.l.b16 %v775
    %v812 = vunpack.c.l.b16 %v776
    %v813 = vunpack.c.l.b16 %v777
    %v814 = vunpack.c.l.b16 %v778
    %v815 = vunpack.c.l.b16 %v779
    %v816 = vunpack.c.l.b16 %v780
    %v817 = vunpack.c.l.b16 %v781
    %v818 = vunpack.c.l.b16 %v782
    %v819 = vunpack.c.l.b16 %v783
    %v820 = vunpack.c.l.b16 %v784
    %v821 = vpack.c.b16 %v806, %v805
    %v822 = vpack.c.b16 %v808, %v807
    %v823 = vpack.c.b16 %v810, %v809
    %v824 = vpack.c.b16 %v812, %v811
    %v825 = vpack.c.b16 %v814, %v813
    %v826 = vpack.c.b16 %v816, %v815
    %v827 = vpack.c.b16 %v818, %v817
    %v828 = vpack.c.b16 %v820, %v819
    %837 = vmatpush.bf16.msra.mxu0 %v828
    %838 = vmatpush.bf16.msra.mxu0 %v827
    %839 = vmatpush.bf16.msra.mxu0 %v826
    %840 = vmatpush.bf16.msra.mxu0 %v825
    %841 = vmatpush.bf16.msra.mxu0 %v824
    %842 = vmatpush.bf16.msra.mxu0 %v823
    %843 = vmatpush.bf16.msra.mxu0 %v822
    %844 = vmatpush.bf16.msra.mxu0 %v821
    %845 = vmatmul.bf16.gmra.mxu0 %v768
    %v846 = vpop.f32.mrf.mxu0
    %v847 = vadd.f32 %v787, %v846
    %v848 = vpop.f32.mrf.mxu0
    %849 = vdwg.mxu0
    %850 = vst [vmem:[#allocation9] sm:$0xff] %v847
    // Predicated region
    $region54: #{tpu_custom_call.1} parent=1 // pred_check
      _
    $region55: #{tpu_custom_call.1} parent=1 // pred_check_branch
      %852 = sbr.rel (0) target = $region57
    $region56: #{tpu_custom_call.1} parent=1 // pred_region
      %854 = vsyncadd [#allocation5], 0
      %s856 = sshll.u32 [#allocation9], 4
      %s857 = int_to_ptr.vmem [resolvable:$true] %s856
      %s858 = sshll.u32 %s10, 4
      %s859 = int_to_ptr.hbm [resolvable:$true] %s858
      %861 = dma.vmem_to_hbm [thread:$0]  %s857, 128, %s859, [#allocation5]
    $region57: #{tpu_custom_call.1} parent=1 // pred_fallthru
      _
    // Predicated region
    $region58: #{tpu_custom_call.1} parent=1 // pred_check
      _
    $region59: #{tpu_custom_call.1} parent=1 // pred_check_branch
      %863 = sbr.rel (0) target = $region61
    $region60: #{tpu_custom_call.1} parent=1 // pred_region
      %865 = dma.done [#allocation5], 128
    $region61: #{tpu_custom_call.1} parent=1 // pred_fallthru
      _
    %866 = vsyncpa [#allocation4], 1
    %867 = vsyncpa [#allocation7], 1
    %868 = vsyncpa [#allocation5], 1

</llo_original>
